<compile_context>
chip_gen: v7x
topology: tpu7x:2x2x1
jax: 0.10.0
libtpu: 0.0.40
codegen_flags: <defaults>
</compile_context>

<pallas_src>
import functools

import jax
import jax.numpy as jnp
from jax.experimental import pallas as pl
from jax.experimental.pallas import tpu as pltpu


_VMEM_LIMIT_BYTES = 28 << 20     # < v7x 32 MiB scoped default; fine on v5e/v6e
_TARGET_TILE_BYTES = 4 << 20     # one tile; double-buffered x + y ~= 16 MiB


def _sublane_pack(itemsize):
    # sublane packing multiple: f32 -> 8, bf16 -> 16, int8/fp8 -> 32
    return max(8, 32 // max(1, itemsize))


def _choose_tiles(B, D, itemsize, tile_b=None, tile_d=None,
                  target_bytes=_TARGET_TILE_BYTES):
    """Pick (tile_b, tile_d): ~target_bytes per tile, dtype/VMEM aware, and
    satisfying the (8,128) block constraints (or full-dim blocks)."""
    pack = _sublane_pack(itemsize)
    if tile_d is None:
        # Keep the full feature dim unless even a `pack`-row slab exceeds the
        # budget (very wide D); then tile D in multiples of 128.
        if D <= 128 or D * pack * itemsize <= target_bytes:
            td = D
        else:
            td = max(128, (target_bytes // (pack * itemsize)) // 128 * 128)
    else:
        td = tile_d
    if tile_b is None:
        rows = target_bytes // max(1, td * itemsize)
        rows = max(pack, (rows // pack) * pack)
        tb = B if rows >= B else rows      # full-dim block is always legal
    else:
        tb = tile_b
    return tb, td


# ---------------------------------------------------------------------------
# Kernel 1: data-dependent initialization (streaming shifted two-moment)
# grid = (D/td, B/tb); D axis independent ("parallel"), batch axis reduces.
# ---------------------------------------------------------------------------
def _actnorm_init_kernel(x_ref, loc_ref, log_scale_ref,
                         shift_ref, sum_ref, sq_ref, *,
                         batch, tile_b, mask_last):
    b = pl.program_id(1)
    nb = pl.num_programs(1)

    @pl.when(b == 0)
    def _():
        # Per-feature shift from the first row of this D-block: avoids the
        # catastrophic cancellation of the naive sq - n*mean^2 formula.
        shift_ref[...] = x_ref[0:1, :].astype(jnp.float32)
        sum_ref[...] = jnp.zeros_like(sum_ref)
        sq_ref[...] = jnp.zeros_like(sq_ref)

    xc = x_ref[...].astype(jnp.float32) - shift_ref[...]     # (tb, td)

    if mask_last:
        # Only the ragged final batch tile needs row masking (its trailing
        # rows in VMEM are undefined).  Full tiles accumulate unmasked.
        @pl.when(b == nb - 1)
        def _():
            row = jax.lax.broadcasted_iota(jnp.int32, xc.shape, 0) + b * tile_b
            xm = jnp.where(row < batch, xc, 0.0)
            sum_ref[...] += jnp.sum(xm, axis=0, keepdims=True)
            sq_ref[...] += jnp.sum(xm * xm, axis=0, keepdims=True)

        @pl.when(b != nb - 1)
        def _():
            sum_ref[...] += jnp.sum(xc, axis=0, keepdims=True)
            sq_ref[...] += jnp.sum(xc * xc, axis=0, keepdims=True)
    else:
        sum_ref[...] += jnp.sum(xc, axis=0, keepdims=True)
        sq_ref[...] += jnp.sum(xc * xc, axis=0, keepdims=True)

    @pl.when(b == nb - 1)
    def _():
        n = jnp.float32(batch)
        s1 = sum_ref[...]
        s2 = sq_ref[...]
        mean = shift_ref[...] + s1 / n
        # torch.std default is unbiased (ddof=1); guard batch == 1 (torch
        # would give NaN -> std>0 False -> 1.0; the guard yields the same).
        var = jnp.maximum(s2 - s1 * s1 / n, 0.0) / jnp.maximum(n - 1.0, 1.0)
        std = jnp.sqrt(var)
        std = jnp.where(std > 0.0, std, 1.0)
        loc_ref[...] = mean.astype(loc_ref.dtype)
        log_scale_ref[...] = jnp.log(std).astype(log_scale_ref.dtype)


def actnorm_init(x, *, tile_b=None, tile_d=None):
    B, D = x.shape
    tb, td = _choose_tiles(B, D, x.dtype.itemsize, tile_b, tile_d)
    kernel = functools.partial(_actnorm_init_kernel, batch=B, tile_b=tb,
                               mask_last=(B % tb != 0))
    loc, log_scale = pl.pallas_call(
        kernel,
        out_shape=(
            jax.ShapeDtypeStruct((1, D), jnp.float32),    # loc
            jax.ShapeDtypeStruct((1, D), jnp.float32),    # log_scale
        ),
        grid=(pl.cdiv(D, td), pl.cdiv(B, tb)),
        in_specs=[pl.BlockSpec((tb, td), lambda d, b: (b, d))],
        out_specs=(
            pl.BlockSpec((1, td), lambda d, b: (0, d)),
            pl.BlockSpec((1, td), lambda d, b: (0, d)),
        ),
        scratch_shapes=[
            pltpu.VMEM((1, td), jnp.float32),             # shift
            pltpu.VMEM((1, td), jnp.float32),             # sum(x - shift)
            pltpu.VMEM((1, td), jnp.float32),             # sum((x - shift)^2)
        ],
        compiler_params=pltpu.CompilerParams(
            dimension_semantics=("parallel", "arbitrary"),
            vmem_limit_bytes=_VMEM_LIMIT_BYTES),
    )(x)
    return loc, log_scale


# ---------------------------------------------------------------------------
# Kernel 2: forward / reverse affine transform
# grid = (D/td, B/tb); both axes embarrassingly parallel.
# ---------------------------------------------------------------------------
def _actnorm_fwd_kernel(x_ref, loc_ref, log_scale_ref, y_ref, *, rev):
    x = x_ref[...].astype(jnp.float32)          # (tb, td)
    loc = loc_ref[...].astype(jnp.float32)      # (1, td), broadcasts over rows
    ls = log_scale_ref[...].astype(jnp.float32)
    if rev:
        y = jnp.exp(ls) * x + loc
    else:
        y = (x - loc) * jnp.exp(-ls)            # multiply, not divide
    y_ref[...] = y.astype(y_ref.dtype)


def actnorm_forward(x, loc, log_scale, *, rev=False, tile_b=None, tile_d=None):
    orig_B, orig_D = x.shape
    B, D = orig_B, orig_D
    # Lane-dense repack for narrow feature dims: D < 128 would lower to
    # masked partial stores at low lane utilization.  View x as (B//k, k*D)
    # (contiguous row-major reshape) with params tiled k times so the output
    # last dim is exactly 128 lanes.
    if tile_d is None and D < 128 and 128 % D == 0:
        k = 128 // D
        if k > 1 and B % k == 0:
            x = x.reshape(B // k, k * D)
            loc = jnp.tile(loc, (1, k))
            log_scale = jnp.tile(log_scale, (1, k))
            B, D = x.shape
    tb, td = _choose_tiles(B, D, x.dtype.itemsize, tile_b, tile_d)
    kernel = functools.partial(_actnorm_fwd_kernel, rev=rev)
    y = pl.pallas_call(
        kernel,
        out_shape=jax.ShapeDtypeStruct((B, D), x.dtype),
        grid=(pl.cdiv(D, td), pl.cdiv(B, tb)),
        in_specs=[
            pl.BlockSpec((tb, td), lambda d, b: (b, d)),
            pl.BlockSpec((1, td), lambda d, b: (0, d)),
            pl.BlockSpec((1, td), lambda d, b: (0, d)),
        ],
        out_specs=pl.BlockSpec((tb, td), lambda d, b: (b, d)),
        compiler_params=pltpu.CompilerParams(
            dimension_semantics=("parallel", "parallel"),
            vmem_limit_bytes=_VMEM_LIMIT_BYTES),
    )(x, loc, log_scale)
    return y.reshape(orig_B, orig_D)


# ---------------------------------------------------------------------------
# Thin Python wrapper mirroring the nn.Module interface.
# NOTE: __call__ mutates Python state on the first call (data-dependent
# init), so do not wrap the first call in jax.jit; use the functional
# actnorm_init / actnorm_forward APIs for traced code.
# ---------------------------------------------------------------------------
class ActNorm:
    def __init__(self, dim):
        self.dim = dim
        self.is_initialized = False
        # torch.empty(...) is uninitialized; always overwritten by the
        # data-dependent init on the first forward, so zeros here.
        self.log_scale = jnp.zeros((1, dim), jnp.float32)
        self.loc = jnp.zeros((1, dim), jnp.float32)

    def initialize(self, batch, tile_b=None, tile_d=None):
        self.loc, self.log_scale = actnorm_init(batch, tile_b=tile_b,
                                                tile_d=tile_d)
        self.is_initialized = True

    def _jacobian(self, rev=False):
        j = jnp.sum(self.log_scale)      # sum_except_batch(log_scale)[0]
        return j if rev else -j

    def __call__(self, x, rev=False, cal_jacobian=False,
                 tile_b=None, tile_d=None):
        if not self.is_initialized:
            self.initialize(x, tile_b=tile_b, tile_d=tile_d)
        y = actnorm_forward(x, self.loc, self.log_scale, rev=rev,
                            tile_b=tile_b, tile_d=tile_d)
        if cal_jacobian:
            return y, self._jacobian(rev)
        return y


# ---------------------------------------------------------------------------
def _reference_check(x, model, tile_b=None, tile_d=None, tol=1e-4):
    y, logdet = model(x, rev=False, cal_jacobian=True,
                      tile_b=tile_b, tile_d=tile_d)
    y = jax.block_until_ready(y)
    logdet = jax.block_until_ready(logdet)

    mean_ref = jnp.mean(x, axis=0, keepdims=True)
    std_ref = jnp.std(x, axis=0, keepdims=True, ddof=1)
    std_ref = jnp.where(std_ref > 0, std_ref, 1.0)
    y_ref = (x - mean_ref) / std_ref
    logdet_ref = -jnp.sum(jnp.log(std_ref))

    assert jnp.allclose(y, y_ref, atol=tol, rtol=tol), "forward mismatch"
    assert jnp.allclose(logdet, logdet_ref, atol=tol, rtol=tol), "jacobian mismatch"

    x_rec = model(y, rev=True, tile_b=tile_b, tile_d=tile_d)
    x_rec = jax.block_until_ready(x_rec)
    assert jnp.allclose(x_rec, x, atol=1e-3, rtol=1e-3), "inverse mismatch"


if __name__ == "__main__":
    key = jax.random.PRNGKey(0)
    k1, k2 = jax.random.split(key)

    # Small shape consistent with the module (batch=8, dim=32); exercises the
    # lane-dense repack path (k=4 -> (2, 128)).
    x_small = jax.random.normal(k1, (8, 32), dtype=jnp.float32)
    _reference_check(x_small, ActNorm(32))

    # Non-tile-multiple batch with forced small tiles: exercises the ragged
    # (unpadded) edge blocks, the masked last-tile init accumulate, and the
    # D-tiled (two-axis) grid.
    x_big = jax.random.normal(k2, (300, 256), dtype=jnp.float32)
    _reference_check(x_big, ActNorm(256), tile_b=64, tile_d=128)

    print("KERNEL_OK")
</pallas_src>

<mosaic_0001>
module attributes {stable_mosaic.version = 11 : i64} {
  func.func @_actnorm_init_kernel(%arg0: i32, %arg1: i32, %arg2: memref<8x32xf32, #tpu.memory_space<vmem>>, %arg3: memref<1x32xf32, #tpu.memory_space<vmem>>, %arg4: memref<1x32xf32, #tpu.memory_space<vmem>>, %arg5: memref<1x32xf32, #tpu.memory_space<vmem>>, %arg6: memref<1x32xf32, #tpu.memory_space<vmem>>, %arg7: memref<1x32xf32, #tpu.memory_space<vmem>>) attributes {dimension_semantics = [#tpu.dimension_semantics<parallel>, #tpu.dimension_semantics<arbitrary>], iteration_bounds = array<i64: 1, 1>, scalar_prefetch = 0 : i64, scratch_operands = 3 : i64, tpu.core_type = #tpu.core_type<tc>, window_params = [{transform_indices = @transform_0, window_bounds = array<i64: 8, 32>}, {transform_indices = @transform_1, window_bounds = array<i64: 1, 32>}, {transform_indices = @transform_2, window_bounds = array<i64: 1, 32>}]} {
    %c0_i32 = arith.constant 0 : i32
    %0 = arith.cmpi eq, %arg1, %c0_i32 : i32
    %1 = arith.extui %0 : i1 to i32
    %c0_i32_0 = arith.constant 0 : i32
    %2 = arith.cmpi ne, %1, %c0_i32_0 : i32
    scf.if %2 {
      %c0_15 = arith.constant 0 : index
      %c0_16 = arith.constant 0 : index
      %21 = vector.load %arg2[%c0_15, %c0_16] : memref<8x32xf32, #tpu.memory_space<vmem>>, vector<1x32xf32>
      %c0_17 = arith.constant 0 : index
      %c0_18 = arith.constant 0 : index
      %22 = vector.load %arg5[%c0_17, %c0_18] : memref<1x32xf32, #tpu.memory_space<vmem>>, vector<1x32xf32>
      tpu.vector_store %arg5[%c0_17, %c0_18], %21 {strides = array<i32>} : memref<1x32xf32, #tpu.memory_space<vmem>>, vector<1x32xf32>,
      %cst_19 = arith.constant 0.000000e+00 : f32
      %23 = vector.broadcast %cst_19 : f32 to vector<1x32xf32>
      %c0_20 = arith.constant 0 : index
      %c0_21 = arith.constant 0 : index
      %24 = vector.load %arg6[%c0_20, %c0_21] : memref<1x32xf32, #tpu.memory_space<vmem>>, vector<1x32xf32>
      tpu.vector_store %arg6[%c0_20, %c0_21], %23 {strides = array<i32>} : memref<1x32xf32, #tpu.memory_space<vmem>>, vector<1x32xf32>,
      %cst_22 = arith.constant 0.000000e+00 : f32
      %25 = vector.broadcast %cst_22 : f32 to vector<1x32xf32>
      %c0_23 = arith.constant 0 : index
      %c0_24 = arith.constant 0 : index
      %26 = vector.load %arg7[%c0_23, %c0_24] : memref<1x32xf32, #tpu.memory_space<vmem>>, vector<1x32xf32>
      tpu.vector_store %arg7[%c0_23, %c0_24], %25 {strides = array<i32>} : memref<1x32xf32, #tpu.memory_space<vmem>>, vector<1x32xf32>,
    } else {
    }
    %c0 = arith.constant 0 : index
    %c0_1 = arith.constant 0 : index
    %3 = vector.load %arg2[%c0, %c0_1] : memref<8x32xf32, #tpu.memory_space<vmem>>, vector<8x32xf32>
    %c0_2 = arith.constant 0 : index
    %c0_3 = arith.constant 0 : index
    %4 = vector.load %arg5[%c0_2, %c0_3] : memref<1x32xf32, #tpu.memory_space<vmem>>, vector<1x32xf32>
    %5 = vector.broadcast %4 : vector<1x32xf32> to vector<8x32xf32>
    %6 = arith.subf %3, %5 : vector<8x32xf32>
    %c0_4 = arith.constant 0 : index
    %c0_5 = arith.constant 0 : index
    %7 = vector.load %arg6[%c0_4, %c0_5] : memref<1x32xf32, #tpu.memory_space<vmem>>, vector<1x32xf32>
    %cst = arith.constant dense<0.000000e+00> : vector<32xf32>
    %8 = vector.multi_reduction <add>, %6, %cst [0] : vector<8x32xf32> to vector<32xf32>
    %9 = vector.shape_cast %8 : vector<32xf32> to vector<1x32xf32>
    %10 = arith.addf %7, %9 : vector<1x32xf32>
    %c0_6 = arith.constant 0 : index
    %c0_7 = arith.constant 0 : index
    %11 = vector.load %arg6[%c0_6, %c0_7] : memref<1x32xf32, #tpu.memory_space<vmem>>, vector<1x32xf32>
    tpu.vector_store %arg6[%c0_6, %c0_7], %10 {strides = array<i32>} : memref<1x32xf32, #tpu.memory_space<vmem>>, vector<1x32xf32>,
    %c0_8 = arith.constant 0 : index
    %c0_9 = arith.constant 0 : index
    %12 = vector.load %arg7[%c0_8, %c0_9] : memref<1x32xf32, #tpu.memory_space<vmem>>, vector<1x32xf32>
    %13 = arith.mulf %6, %6 : vector<8x32xf32>
    %cst_10 = arith.constant dense<0.000000e+00> : vector<32xf32>
    %14 = vector.multi_reduction <add>, %13, %cst_10 [0] : vector<8x32xf32> to vector<32xf32>
    %15 = vector.shape_cast %14 : vector<32xf32> to vector<1x32xf32>
    %16 = arith.addf %12, %15 : vector<1x32xf32>
    %c0_11 = arith.constant 0 : index
    %c0_12 = arith.constant 0 : index
    %17 = vector.load %arg7[%c0_11, %c0_12] : memref<1x32xf32, #tpu.memory_space<vmem>>, vector<1x32xf32>
    tpu.vector_store %arg7[%c0_11, %c0_12], %16 {strides = array<i32>} : memref<1x32xf32, #tpu.memory_space<vmem>>, vector<1x32xf32>,
    %c0_i32_13 = arith.constant 0 : i32
    %18 = arith.cmpi eq, %arg1, %c0_i32_13 : i32
    %19 = arith.extui %18 : i1 to i32
    %c0_i32_14 = arith.constant 0 : i32
    %20 = arith.cmpi ne, %19, %c0_i32_14 : i32
    scf.if %20 {
      %c0_15 = arith.constant 0 : index
      %c0_16 = arith.constant 0 : index
      %21 = vector.load %arg6[%c0_15, %c0_16] : memref<1x32xf32, #tpu.memory_space<vmem>>, vector<1x32xf32>
      %c0_17 = arith.constant 0 : index
      %c0_18 = arith.constant 0 : index
      %22 = vector.load %arg7[%c0_17, %c0_18] : memref<1x32xf32, #tpu.memory_space<vmem>>, vector<1x32xf32>
      %c0_19 = arith.constant 0 : index
      %c0_20 = arith.constant 0 : index
      %23 = vector.load %arg5[%c0_19, %c0_20] : memref<1x32xf32, #tpu.memory_space<vmem>>, vector<1x32xf32>
      %cst_21 = arith.constant 8.000000e+00 : f32
      %24 = vector.broadcast %cst_21 : f32 to vector<1x32xf32>
      %25 = arith.divf %21, %24 : vector<1x32xf32>
      %26 = arith.addf %23, %25 : vector<1x32xf32>
      %27 = arith.mulf %21, %21 : vector<1x32xf32>
      %cst_22 = arith.constant 8.000000e+00 : f32
      %28 = vector.broadcast %cst_22 : f32 to vector<1x32xf32>
      %29 = arith.divf %27, %28 : vector<1x32xf32>
      %30 = arith.subf %22, %29 : vector<1x32xf32>
      %cst_23 = arith.constant 0.000000e+00 : f32
      %31 = vector.broadcast %cst_23 : f32 to vector<1x32xf32>
      %32 = arith.maximumf %30, %31 : vector<1x32xf32>
      %cst_24 = arith.constant 8.000000e+00 : f32
      %cst_25 = arith.constant 1.000000e+00 : f32
      %33 = arith.subf %cst_24, %cst_25 : f32
      %cst_26 = arith.constant 1.000000e+00 : f32
      %34 = arith.maximumf %33, %cst_26 : f32
      %35 = vector.broadcast %34 : f32 to vector<1x32xf32>
      %36 = arith.divf %32, %35 : vector<1x32xf32>
      %37 = math.sqrt %36 : vector<1x32xf32>
      %cst_27 = arith.constant 0.000000e+00 : f32
      %38 = vector.broadcast %cst_27 : f32 to vector<1x32xf32>
      %39 = arith.cmpf ogt, %37, %38 : vector<1x32xf32>
      %cst_28 = arith.constant 1.000000e+00 : f32
      %40 = vector.broadcast %cst_28 : f32 to vector<1x32xf32>
      %41 = arith.select %39, %37, %40 : vector<1x32xi1>, vector<1x32xf32>
      %c0_29 = arith.constant 0 : index
      %c0_30 = arith.constant 0 : index
      %42 = vector.load %arg3[%c0_29, %c0_30] : memref<1x32xf32, #tpu.memory_space<vmem>>, vector<1x32xf32>
      tpu.vector_store %arg3[%c0_29, %c0_30], %26 {strides = array<i32>} : memref<1x32xf32, #tpu.memory_space<vmem>>, vector<1x32xf32>,
      %43 = math.log %41 : vector<1x32xf32>
      %c0_31 = arith.constant 0 : index
      %c0_32 = arith.constant 0 : index
      %44 = vector.load %arg4[%c0_31, %c0_32] : memref<1x32xf32, #tpu.memory_space<vmem>>, vector<1x32xf32>
      tpu.vector_store %arg4[%c0_31, %c0_32], %43 {strides = array<i32>} : memref<1x32xf32, #tpu.memory_space<vmem>>, vector<1x32xf32>,
    } else {
    }
    return
  }
  func.func @transform_0(%arg0: i32, %arg1: i32) -> (i32, i32) {
    %c0_i32 = arith.constant 0 : i32
    return %arg1, %arg0 : i32, i32
  }
  func.func @transform_1(%arg0: i32, %arg1: i32) -> (i32, i32) {
    %c0_i32 = arith.constant 0 : i32
    %c0_i32_0 = arith.constant 0 : i32
    return %c0_i32, %arg0 : i32, i32
  }
  func.func @transform_2(%arg0: i32, %arg1: i32) -> (i32, i32) {
    %c0_i32 = arith.constant 0 : i32
    %c0_i32_0 = arith.constant 0 : i32
    return %c0_i32, %arg0 : i32, i32
  }
}

</mosaic_0001>

<llo_original>
// kernel: tpu_custom_call.1
$region0: #{tpu_custom_call.1}
  #allocation0 [shape = 'u32[]', space=smem, size = 0x4, offset = 0x4, fixed_abs, tag = 'smem constant byte address 0x4 - core index']
  #allocation1 [shape = 'u32[144,128]{1,0:T(1,128)}', space=vmem, size = 0x12000, scoped, tag = 'internal scratch']
  #allocation2 [shape = 'f32[1,32]{1,0:T(1,128)}', space=vmem, size = 0x200, scoped, tag = 'scratch operand']
  #allocation3 [shape = 'f32[1,32]{1,0:T(1,128)}', space=vmem, size = 0x200, scoped, tag = 'scratch operand']
  #allocation4 [shape = 'f32[1,32]{1,0:T(1,128)}', space=vmem, size = 0x200, scoped, tag = 'scratch operand']
  %s0 = inlined_call_operand.hbm [shape: f32[8,32], index: 0, kind: input, shape index: {}]
  %s1 = inlined_call_operand.hbm [shape: f32[1,32], index: 1, kind: output, shape index: {0}]
  %s2 = inlined_call_operand.hbm [shape: f32[1,32], index: 2, kind: output, shape index: {1}]
  %3 = xla_tuple %s1, %s2
  %s4 = sld [smem:[#allocation0]]
  $region34: #{tpu_custom_call.1} parent=0
    _
  %s6 = ssub.s32 1, %s4
  %s7 = scalar_select 0, %s6, %s4
  $region1: #{tpu_custom_call.1} parent=0
    #allocation5 [shape = 'u8[4096]{0}', space=vmem, size = 0x1000, scoped, tag = 'input window, operand 0, single buffered']
    #allocation6 [shape = 's32[1]{0}', space=sflag, size = 0x4, scoped, tag = 'scoped memory for tpu_custom_call.1']
    #allocation7 [shape = 's32[1]{0}', space=sflag, size = 0x4, scoped, tag = 'scoped memory for tpu_custom_call.1']
    #allocation8 [shape = 'u8[512]{0}', space=vmem, size = 0x400, scoped, tag = 'output window, operand 0, single buffered']
    #allocation9 [shape = 'u8[512]{0}', space=vmem, size = 0x400, scoped, tag = 'output window, operand 1, single buffered']
    #allocation10 [shape = 's32[1]{0}', space=sflag, size = 0x4, scoped, tag = 'scoped memory for tpu_custom_call.1']
    %8 = vsyncpa [#allocation6], 0
    %9 = vsyncpa [#allocation7], 0
    %10 = vsyncpa [#allocation10], 0
    // Predicated region
    $region2: #{tpu_custom_call.1} parent=1 // pred_check
      _
    $region3: #{tpu_custom_call.1} parent=1 // pred_check_branch
      %12 = sbr.rel (0) target = $region5
    $region4: #{tpu_custom_call.1} parent=1 // pred_region
      %s14 = ssub.s32 128, 128
      %15 = vsyncadd [#allocation6], %s14
      %s17 = sshll.u32 [#allocation5], 4
      %s18 = int_to_ptr.vmem [resolvable:$true] %s17
      %20 = dma.hbm_to_vmem [thread:$0]  %s0, 128, %s18, [#allocation6]
    $region5: #{tpu_custom_call.1} parent=1 // pred_fallthru
      _
    // Predicated region
    $region6: #{tpu_custom_call.1} parent=1 // pred_check
      _
    $region7: #{tpu_custom_call.1} parent=1 // pred_check_branch
      %22 = sbr.rel (0) target = $region9
    $region8: #{tpu_custom_call.1} parent=1 // pred_region
      %23 = dma.done [#allocation6], 128
    $region9: #{tpu_custom_call.1} parent=1 // pred_fallthru
      _
    %p24 = scmp.eq.s32.totalorder 0, 0
    // Predicated region
    $region10: #{tpu_custom_call.1} parent=1 // pred_check
      %p25 = pneg %p24
    $region11: #{tpu_custom_call.1} parent=1 // pred_check_branch
      %27 = sbr.rel (%p25) target = $region13
    $region12: #{tpu_custom_call.1} parent=1 // pred_region
      %v28 = vld [vmem:[#allocation5] sm:$0x1]
      %vm29 = vcmask 253952
      %30 = vst.msk [vmem:[#allocation2] sm:$0x1] %vm29, %v28
      %31 = vst.msk [vmem:[#allocation3] sm:$0x1] %vm29, 0.0
      %32 = vst.msk [vmem:[#allocation4] sm:$0x1] %vm29, 0.0
    $region13: #{tpu_custom_call.1} parent=1 // pred_fallthru
      _
    %v33 = vld [vmem:[#allocation5] sm:$0xff]
    %v34 = vld [vmem:[#allocation2] sm:$0x1]
    %v36 = vlaneseq
    %v37 = vshrl.u32 %v36, 7
    %v38 = vsub.s32 0, %v37
    %v39 = vrot.slane %v34, %v38
    %v41 = vsub.f32 %v33, %v39
    %v42 = vld [vmem:[#allocation3] sm:$0x1]
    %vm43 = vcmask 261120
    %v44 = vsel %vm43, %v41, 0.0
    %v45 = vrot.slane %v44, 4
    %v46 = vadd.f32 %v44, %v45
    %v47 = vrot.slane %v46, 2
    %v48 = vadd.f32 %v46, %v47
    %v49 = vrot.slane %v48, 1
    %v50 = vadd.f32 %v48, %v49
    %v51 = vadd.f32 %v42, %v50
    %vm52 = vcmask 253952
    %53 = vst.msk [vmem:[#allocation3] sm:$0x1] %vm52, %v51
    %v54 = vld [vmem:[#allocation4] sm:$0x1]
    %v55 = vmul.f32 %v41, %v41
    %v56 = vsel %vm43, %v55, 0.0
    %v57 = vrot.slane %v56, 4
    %v58 = vadd.f32 %v56, %v57
    %v59 = vrot.slane %v58, 2
    %v60 = vadd.f32 %v58, %v59
    %v61 = vrot.slane %v60, 1
    %v62 = vadd.f32 %v60, %v61
    %v63 = vadd.f32 %v54, %v62
    %64 = vst.msk [vmem:[#allocation4] sm:$0x1] %vm52, %v63
    // Predicated region
    $region14: #{tpu_custom_call.1} parent=1 // pred_check
      %p65 = pneg %p24
    $region15: #{tpu_custom_call.1} parent=1 // pred_check_branch
      %67 = sbr.rel (%p65) target = $region17
    $region16: #{tpu_custom_call.1} parent=1 // pred_region
      %v68 = vld [vmem:[#allocation3] sm:$0x1]
      %v69 = vld [vmem:[#allocation4] sm:$0x1]
      %v70 = vld [vmem:[#allocation2] sm:$0x1]
      %v71 = vrcp.pop 8.0
      %v72 = vmul.f32 %v68, %v71
      %v73 = vadd.f32 %v70, %v72
      %v74 = vmul.f32 %v68, %v68
      %v75 = vmul.f32 %v74, %v71
      %v76 = vsub.f32 %v69, %v75
      %v77 = vmax.f32 %v76, 0.0
      %v78 = vrcp.pop 7.0
      %v79 = vmul.f32 %v77, %v78
      %v80 = vrsqrt.pop %v79
      %v81 = vmul.f32 %v79, %v80
      %vm82 = vcmp.eq.f32.partialorder %v79, inf
      %v83 = vsel %vm82, %v79, %v81
      %vm84 = vcmp.eq.f32.partialorder %v79, 0.0
      %v85 = vand.u32 %v79, 2147483648
      %v86 = vsel %vm84, %v85, %v83
      %vm87 = vcmp.gt.f32.partialorder %v86, 0.0
      %v88 = vsel %vm87, %v86, 1.0
      %89 = vst.msk [vmem:[#allocation8] sm:$0x1] %vm52, %v73
      %v90 = vlog2.pop %v88
      %v91 = vmul.f32 %v90, 0.6931472
      %92 = vst.msk [vmem:[#allocation9] sm:$0x1] %vm52, %v91
    $region17: #{tpu_custom_call.1} parent=1 // pred_fallthru
      _
    // Predicated region
    $region18: #{tpu_custom_call.1} parent=1 // pred_check
      _
    $region19: #{tpu_custom_call.1} parent=1 // pred_check_branch
      %94 = sbr.rel (0) target = $region21
    $region20: #{tpu_custom_call.1} parent=1 // pred_region
      %s96 = ssub.s32 16, 16
      %97 = vsyncadd [#allocation7], %s96
      %s99 = sshll.u32 [#allocation8], 4
      %s100 = int_to_ptr.vmem [resolvable:$true] %s99
      %102 = dma.vmem_to_hbm [thread:$0]  %s100, 16, %s1, [#allocation7]
    $region21: #{tpu_custom_call.1} parent=1 // pred_fallthru
      _
    // Predicated region
    $region22: #{tpu_custom_call.1} parent=1 // pred_check
      _
    $region23: #{tpu_custom_call.1} parent=1 // pred_check_branch
      %104 = sbr.rel (0) target = $region25
    $region24: #{tpu_custom_call.1} parent=1 // pred_region
      %s106 = ssub.s32 16, 16
      %107 = vsyncadd [#allocation10], %s106
      %s109 = sshll.u32 [#allocation9], 4
      %s110 = int_to_ptr.vmem [resolvable:$true] %s109
      %112 = dma.vmem_to_hbm [thread:$0]  %s110, 16, %s2, [#allocation10]
    $region25: #{tpu_custom_call.1} parent=1 // pred_fallthru
      _
    // Predicated region
    $region26: #{tpu_custom_call.1} parent=1 // pred_check
      _
    $region27: #{tpu_custom_call.1} parent=1 // pred_check_branch
      %114 = sbr.rel (0) target = $region29
    $region28: #{tpu_custom_call.1} parent=1 // pred_region
      %115 = dma.done [#allocation7], 16
    $region29: #{tpu_custom_call.1} parent=1 // pred_fallthru
      _
    // Predicated region
    $region30: #{tpu_custom_call.1} parent=1 // pred_check
      _
    $region31: #{tpu_custom_call.1} parent=1 // pred_check_branch
      %117 = sbr.rel (0) target = $region33
    $region32: #{tpu_custom_call.1} parent=1 // pred_region
      %118 = dma.done [#allocation10], 16
    $region33: #{tpu_custom_call.1} parent=1 // pred_fallthru
      _
    %119 = vsyncpa [#allocation6], 1
    %120 = vsyncpa [#allocation7], 1
    %121 = vsyncpa [#allocation10], 1

</llo_original>
